<compile_context>
chip_gen: v6e
topology: v6e:2x2x1
jax: 0.10.0
libtpu: 0.0.40
codegen_flags: <defaults>
</compile_context>

<pallas_src>
import jax
import jax.numpy as jnp
import numpy as np
from jax.experimental import pallas as pl
from jax.experimental.pallas import tpu as pltpu


def _pool_params(kernel_size: int):
    """Mirror the module's __init__ kernel/padding selection (width axis only)."""
    if kernel_size == 3:
        return 3, 1
    elif kernel_size == 5:
        return 5, 2
    else:
        return 1, 0


def _build_pool_matrix(C_in: int, C_final: int, kernel_size: int) -> np.ndarray:
    """(C_in, C_final) matrix implementing AvgPool2d((1,k), stride (1,2), pad (0,p),
    count_include_pad=False) along the channel axis, plus zero columns for the
    output-channel padding up to C_final."""
    k, pad = _pool_params(kernel_size)
    out_dim = (C_in + 2 * pad - k) // 2 + 1
    P = np.zeros((C_in, C_final), dtype=np.float32)
    for j in range(out_dim):
        start = 2 * j - pad
        cols = [i for i in range(start, start + k) if 0 <= i < C_in]
        inv = 1.0 / float(len(cols))          # count_include_pad=False divisor
        for i in cols:
            P[i, j] = inv
    return P


def _cdiv(a: int, b: int) -> int:
    return -(-a // b)


def _round_up(a: int, m: int) -> int:
    return _cdiv(a, m) * m


def _en_avg_pool_kernel(x_ref, p_ref, o_ref):
    # x_ref: (TB, g*C_in)           streamed (packed) activation tile
    # p_ref: (g*C_in, g*C_final)    resident block-diagonal pooling matrix
    #                               (depthwise scale + divisors + zero-pad folded in)
    # Single one-pass MXU matmul, f32 accumulation (DEFAULT precision).
    o_ref[...] = jnp.dot(
        x_ref[...], p_ref[...], preferred_element_type=jnp.float32
    ).astype(o_ref.dtype)


def en_avg_pooling_forward(x, en_weight, C_out: int, kernel_size: int,
                           *, target_tile_bytes: int = 4 << 20, interpret: bool = False):
    """Forward pass of EnAvgPOOLING.

    x:         (N, C_in, 1, 1)
    en_weight: (C_in, 1, 1, 1) or (C_in,)  -- weight of nn.Conv2d(C_in, C_in, 1, groups=C_in)
    returns    (N, max(out_dim, C_out), 1, 1)
    """
    N, C_in, H, W = x.shape
    assert H == 1 and W == 1, "EnAvgPOOLING forward requires 1x1 spatial input"

    k, pad = _pool_params(kernel_size)
    out_dim = (C_in + 2 * pad - k) // 2 + 1
    C_final = max(out_dim, C_out)
    itemsize = jnp.dtype(x.dtype).itemsize

    # ---- lane-packing factor: pack g batch rows per lane row when C_in is small ----
    g = max(1, 128 // C_in)
    g = min(g, max(1, N // 8))          # keep >= 8 packed rows when N allows it
    while g > 1 and (N % g != 0 or (g * C_in) * (g * C_final) * 4 > (8 << 20)):
        g -= 1                          # fall back until the free reshape is legal

    # ---- fold depthwise scale into the (block-diagonal) pooling matrix -------------
    P_base = jnp.asarray(_build_pool_matrix(C_in, C_final, kernel_size))   # (C_in, C_final)
    w_col = jnp.asarray(en_weight, dtype=jnp.float32).reshape(C_in, 1)
    P_scaled = w_col * P_base                        # exact fold: diag(w) @ P
    if g > 1:
        P_full = jnp.kron(jnp.eye(g, dtype=jnp.float32), P_scaled)   # (g*C_in, g*C_final)
    else:
        P_full = P_scaled
    p_dtype = jnp.bfloat16 if x.dtype == jnp.bfloat16 else jnp.float32
    P_full = P_full.astype(p_dtype)
    # TODO(synk): for very large C_in (dense P ~ 2*C_in^2 bytes approaching v7x's 64 MiB
    # VMEM), switch to a banded/direct pooling formulation instead of a resident dense P.

    # ---- free (contiguous) reshapes: no HBM copies ----------------------------------
    N_rows = N // g
    C_lane_in = g * C_in
    C_lane_out = g * C_final
    x2d = x.reshape(N_rows, C_lane_in)

    # ---- batch tile: ~target_tile_bytes of streamed input per grid step -------------
    row_in_bytes = C_lane_in * itemsize
    row_out_bytes = C_lane_out * itemsize
    if N_rows <= 8:
        TB = N_rows                                   # single full-extent block
    else:
        TB = max(8, (max(1, target_tile_bytes // row_in_bytes) // 8) * 8)
        TB = min(TB, _round_up(N_rows, 8))
        TB = min(TB, max(8, _round_up(_cdiv(N_rows, 2), 8)))   # >= 2 steps for v7x's 2 TCs
    grid = (_cdiv(N_rows, TB),)                        # ragged last block masked by Pallas

    # ---- VMEM budget (residents + double-buffered in/out tiles) + cost hint ---------
    p_bytes = int(P_full.size) * jnp.dtype(p_dtype).itemsize
    vmem_needed = 2 * TB * (row_in_bytes + row_out_bytes) + p_bytes
    vmem_limit = int(min(max(2 * vmem_needed + (2 << 20), 16 << 20), 64 << 20))
    cost = pl.CostEstimate(
        flops=int(2 * N_rows * C_lane_in * C_lane_out),
        transcendentals=0,
        bytes_accessed=int(N_rows * (row_in_bytes + row_out_bytes) + p_bytes),
    )

    out2d = pl.pallas_call(
        _en_avg_pool_kernel,
        out_shape=jax.ShapeDtypeStruct((N_rows, C_lane_out), x.dtype),
        grid=grid,
        in_specs=[
            pl.BlockSpec((TB, C_lane_in), lambda i: (i, 0)),          # streamed activations
            pl.BlockSpec((C_lane_in, C_lane_out), lambda i: (0, 0)),  # resident pooling matrix
        ],
        out_specs=pl.BlockSpec((TB, C_lane_out), lambda i: (i, 0)),
        compiler_params=pltpu.CompilerParams(
            dimension_semantics=("parallel",),          # batch tiles are independent
            vmem_limit_bytes=vmem_limit,
        ),
        cost_estimate=cost,
        interpret=interpret,
    )(x2d, P_full)

    # (N_rows, g*C_final) -> (N, C_final, 1, 1) is a contiguous, free reshape.
    return out2d.reshape(N, C_final, 1, 1)


def _reference_forward(x_np, w_np, C_out: int, kernel_size: int) -> np.ndarray:
    """Pure NumPy reference of the PyTorch forward (float64 accumulation)."""
    x_np = np.asarray(x_np, dtype=np.float64)
    w_np = np.asarray(w_np, dtype=np.float64).reshape(-1)
    N, C_in = x_np.shape[0], x_np.shape[1]
    k, pad = _pool_params(kernel_size)
    y = x_np.reshape(N, C_in) * w_np[None, :]
    out_dim = (C_in + 2 * pad - k) // 2 + 1
    out = np.zeros((N, out_dim), dtype=np.float64)
    for j in range(out_dim):
        start = 2 * j - pad
        cols = [i for i in range(start, start + k) if 0 <= i < C_in]
        out[:, j] = y[:, cols].sum(axis=1) / len(cols)
    if out_dim < C_out:
        out = np.concatenate([out, np.zeros((N, C_out - out_dim))], axis=1)
    return out.reshape(N, -1, 1, 1).astype(np.float32)


if __name__ == "__main__":
    # Small shapes consistent with the module (spatial must be 1x1).
    configs = [
        # (N, C_in, C_out, kernel_size)
        (16, 32, 20, 3),    # out_dim=16 < C_out=20 -> exercises zero-pad; lane packing g=2
        (10, 32, 10, 5),    # k=5 divisors (1/3,1/4,1/5); out_dim>=C_out -> no pad; ragged grid
        (200, 32, 20, 3),   # g=4 packing, multi-step "parallel" grid with ragged last block
    ]
    key = jax.random.PRNGKey(0)
    for (N, C_in, C_out, ksz) in configs:
        key, kx, kw = jax.random.split(key, 3)
        x = jax.random.normal(kx, (N, C_in, 1, 1), dtype=jnp.float32)
        en_weight = jax.random.normal(kw, (C_in, 1, 1, 1), dtype=jnp.float32)

        out = en_avg_pooling_forward(x, en_weight, C_out, ksz)
        out = jax.block_until_ready(out)

        ref = _reference_forward(np.asarray(x), np.asarray(en_weight), C_out, ksz)
        assert out.shape == ref.shape, (out.shape, ref.shape)
        # Tolerance sized for DEFAULT (one-pass bf16 operand rounding, ~2^-8 relative per
        # pooled term) MXU precision with f32 accumulation.  Pooling-window / divisor /
        # padding mistakes produce O(0.1-1) errors, so they are still caught with margin.
        np.testing.assert_allclose(np.asarray(out), ref, rtol=2e-2, atol=2e-2)
    print("KERNEL_OK")
</pallas_src>

<mosaic_0001>
module attributes {stable_mosaic.version = 11 : i64} {
  func.func @_en_avg_pool_kernel(%arg0: i32, %arg1: memref<8x64xf32, #tpu.memory_space<vmem>>, %arg2: memref<64x40xf32, #tpu.memory_space<vmem>>, %arg3: memref<8x40xf32, #tpu.memory_space<vmem>>) attributes {dimension_semantics = [#tpu.dimension_semantics<parallel>], iteration_bounds = array<i64: 1>, scalar_prefetch = 0 : i64, scratch_operands = 0 : i64, tpu.core_type = #tpu.core_type<tc>, window_params = [{transform_indices = @transform_0, window_bounds = array<i64: 8, 64>}, {pipeline_mode = #tpu.pipeline_mode<synchronous>, transform_indices = @transform_1, window_bounds = array<i64: 64, 40>}, {transform_indices = @transform_2, window_bounds = array<i64: 8, 40>}]} {
    %c0 = arith.constant 0 : index
    %c0_0 = arith.constant 0 : index
    %0 = vector.load %arg1[%c0, %c0_0] : memref<8x64xf32, #tpu.memory_space<vmem>>, vector<8x64xf32>
    %c0_1 = arith.constant 0 : index
    %c0_2 = arith.constant 0 : index
    %1 = vector.load %arg2[%c0_1, %c0_2] : memref<64x40xf32, #tpu.memory_space<vmem>>, vector<64x40xf32>
    %cst = arith.constant dense<0.000000e+00> : vector<8x40xf32>
    %2 = tpu.matmul %0, %1, %cst {dimension_numbers = #tpu.dot_dimension_numbers<[1], [0], [0], [1], [0, 0, 1, 1], [], []>} : vector<8x64xf32>, vector<64x40xf32>, vector<8x40xf32> -> vector<8x40xf32>
    %c0_3 = arith.constant 0 : index
    %c0_4 = arith.constant 0 : index
    %3 = vector.load %arg3[%c0_3, %c0_4] : memref<8x40xf32, #tpu.memory_space<vmem>>, vector<8x40xf32>
    tpu.vector_store %arg3[%c0_3, %c0_4], %2 {strides = array<i32>} : memref<8x40xf32, #tpu.memory_space<vmem>>, vector<8x40xf32>,
    return
  }
  func.func @transform_0(%arg0: i32) -> (i32, i32) {
    %c0_i32 = arith.constant 0 : i32
    %c0_i32_0 = arith.constant 0 : i32
    return %arg0, %c0_i32 : i32, i32
  }
  func.func @transform_1(%arg0: i32) -> (i32, i32) {
    %c0_i32 = arith.constant 0 : i32
    %c0_i32_0 = arith.constant 0 : i32
    %c0_i32_1 = arith.constant 0 : i32
    return %c0_i32, %c0_i32_0 : i32, i32
  }
  func.func @transform_2(%arg0: i32) -> (i32, i32) {
    %c0_i32 = arith.constant 0 : i32
    %c0_i32_0 = arith.constant 0 : i32
    return %arg0, %c0_i32 : i32, i32
  }
}

</mosaic_0001>

<llo_original>
// kernel: tpu_custom_call.1
$region0: #{tpu_custom_call.1}
  #allocation0 [shape = 'u32[]', space=smem, size = 0x4, offset = 0x4, fixed_abs, tag = 'smem constant byte address 0x4 - core index']
  #allocation1 [shape = 'u32[144,128]{1,0:T(1,128)}', space=vmem, size = 0x12000, scoped, tag = 'internal scratch']
  %s0 = inlined_call_operand.vmem [shape: f32[8,64], index: 0, kind: input, shape index: {}]
  %s1 = inlined_call_operand.vmem [shape: f32[64,40], index: 1, kind: input, shape index: {}]
  %s2 = inlined_call_operand.hbm [shape: f32[8,40], index: 2, kind: output, shape index: {}]
  %s3 = sld [smem:[#allocation0]]
  $region18: #{tpu_custom_call.1} parent=0
    _
  %s5 = ssub.s32 1, %s3
  %s6 = scalar_select 0, %s5, %s3
  $region1: #{tpu_custom_call.1} parent=0
    #allocation2 [shape = 'u8[4096]{0}', space=vmem, size = 0x1000, scoped, tag = 'output window, operand 0, single buffered']
    #allocation3 [shape = 's32[1]{0}', space=sflag, size = 0x4, scoped, tag = 'scoped memory for tpu_custom_call.1']
    %7 = vsyncpa [#allocation3], 0
    // Predicated region
    $region2: #{tpu_custom_call.1} parent=1 // pred_check
      _
    $region3: #{tpu_custom_call.1} parent=1 // pred_check_branch
      %9 = sbr.rel (0) target = $region5
    $region4: #{tpu_custom_call.1} parent=1 // pred_region
      _
    $region5: #{tpu_custom_call.1} parent=1 // pred_fallthru
      _
    // Predicated region
    $region6: #{tpu_custom_call.1} parent=1 // pred_check
      _
    $region7: #{tpu_custom_call.1} parent=1 // pred_check_branch
      %11 = sbr.rel (0) target = $region9
    $region8: #{tpu_custom_call.1} parent=1 // pred_region
      _
    $region9: #{tpu_custom_call.1} parent=1 // pred_fallthru
      _
    %v12 = vld [vmem:[%s0] sm:$0xff]
    %v13 = vld [vmem:[%s1] sm:$0xff]
    %v14 = vld [vmem:[%s1 + $0x8] sm:$0xff]
    %v15 = vld [vmem:[%s1 + $0x10] sm:$0xff]
    %v16 = vld [vmem:[%s1 + $0x18] sm:$0xff]
    %v17 = vld [vmem:[%s1 + $0x20] sm:$0xff]
    %v18 = vld [vmem:[%s1 + $0x28] sm:$0xff]
    %v19 = vld [vmem:[%s1 + $0x30] sm:$0xff]
    %v20 = vld [vmem:[%s1 + $0x38] sm:$0xff]
    %vm21 = vcmask 523264
    %v23 = vsel %vm21, %v12, 0
    %25 = vmatprep.subr.mxu0 0.0
    %26 = vmatpush1.msra.mxu0 0.0
    %27 = vmatprep.subr.mxu0 0.0
    %28 = vmatpush1.msra.mxu0 0.0
    %29 = vmatprep.subr.mxu0 0.0
    %30 = vmatpush1.msra.mxu0 0.0
    %31 = vmatprep.subr.mxu0 0.0
    %32 = vmatpush1.msra.mxu0 0.0
    %33 = vmatprep.subr.mxu0 0.0
    %34 = vmatpush1.msra.mxu0 0.0
    %35 = vmatprep.subr.mxu0 0.0
    %36 = vmatpush1.msra.mxu0 0.0
    %37 = vmatprep.subr.mxu0 0.0
    %38 = vmatpush1.msra.mxu0 0.0
    %39 = vmatprep.subr.mxu0 0.0
    %40 = vmatpush1.msra.mxu0 0.0
    %41 = vmatprep.subr.mxu0 0.0
    %42 = vmatpush1.msra.mxu0 %v20
    %43 = vmatprep.subr.mxu0 0.0
    %44 = vmatpush1.msra.mxu0 %v19
    %45 = vmatprep.subr.mxu0 0.0
    %46 = vmatpush1.msra.mxu0 %v18
    %47 = vmatprep.subr.mxu0 0.0
    %48 = vmatpush1.msra.mxu0 %v17
    %49 = vmatprep.subr.mxu0 0.0
    %50 = vmatpush1.msra.mxu0 %v16
    %51 = vmatprep.subr.mxu0 0.0
    %52 = vmatpush1.msra.mxu0 %v15
    %53 = vmatprep.subr.mxu0 0.0
    %54 = vmatpush1.msra.mxu0 %v14
    %55 = vmatprep.subr.mxu0 0.0
    %56 = vmatpush1.msra.mxu0 %v13
    %57 = vmatprep.subr.mxu0 0.0
    %58 = vmatpush2.msra.mxu0 0.0
    %59 = vmatprep.subr.mxu0 0.0
    %60 = vmatpush2.msra.mxu0 0.0
    %61 = vmatprep.subr.mxu0 0.0
    %62 = vmatpush2.msra.mxu0 0.0
    %63 = vmatprep.subr.mxu0 0.0
    %64 = vmatpush2.msra.mxu0 0.0
    %65 = vmatprep.subr.mxu0 0.0
    %66 = vmatpush2.msra.mxu0 0.0
    %67 = vmatprep.subr.mxu0 0.0
    %68 = vmatpush2.msra.mxu0 0.0
    %69 = vmatprep.subr.mxu0 0.0
    %70 = vmatpush2.msra.mxu0 0.0
    %71 = vmatprep.subr.mxu0 0.0
    %72 = vmatpush2.msra.mxu0 0.0
    %73 = vmatprep.subr.mxu0 0.0
    %74 = vmatpush2.msra.mxu0 0.0
    %75 = vmatprep.subr.mxu0 0.0
    %76 = vmatpush2.msra.mxu0 0.0
    %77 = vmatprep.subr.mxu0 0.0
    %78 = vmatpush2.msra.mxu0 0.0
    %79 = vmatprep.subr.mxu0 0.0
    %80 = vmatpush2.msra.mxu0 0.0
    %81 = vmatprep.subr.mxu0 0.0
    %82 = vmatpush2.msra.mxu0 0.0
    %83 = vmatprep.subr.mxu0 0.0
    %84 = vmatpush2.msra.mxu0 0.0
    %85 = vmatprep.subr.mxu0 0.0
    %86 = vmatpush2.msra.mxu0 0.0
    %87 = vmatprep.subr.mxu0 0.0
    %88 = vmatpush2.msra.mxu0 0.0
    %89 = vmatprep.mubr.f32.mxu0 0.0
    %90 = vmatmul.mubr.f32.gmra.mxu0 %v23
    %v91 = vpop.f32.mrf.mxu0
    %v92 = vadd.f32 0.0, %v91
    %v93 = vpop.f32.mrf.mxu0
    %94 = vdwg.mxu0
    %vm95 = vcmask 326656
    %96 = vst.msk [vmem:[#allocation2] sm:$0xff] %vm95, %v92
    // Predicated region
    $region10: #{tpu_custom_call.1} parent=1 // pred_check
      _
    $region11: #{tpu_custom_call.1} parent=1 // pred_check_branch
      %98 = sbr.rel (0) target = $region13
    $region12: #{tpu_custom_call.1} parent=1 // pred_region
      %s100 = ssub.s32 128, 128
      %101 = vsyncadd [#allocation3], %s100
      %s103 = sshll.u32 [#allocation2], 4
      %s104 = int_to_ptr.vmem [resolvable:$true] %s103
      %106 = dma.vmem_to_hbm [thread:$0]  %s104, 128, %s2, [#allocation3]
    $region13: #{tpu_custom_call.1} parent=1 // pred_fallthru
      _
    // Predicated region
    $region14: #{tpu_custom_call.1} parent=1 // pred_check
      _
    $region15: #{tpu_custom_call.1} parent=1 // pred_check_branch
      %108 = sbr.rel (0) target = $region17
    $region16: #{tpu_custom_call.1} parent=1 // pred_region
      %109 = dma.done [#allocation3], 128
    $region17: #{tpu_custom_call.1} parent=1 // pred_fallthru
      _
    %110 = vsyncpa [#allocation3], 1

</llo_original>
